<compile_context>
chip_gen: v5e
topology: v5e:2x2
jax: 0.10.0
libtpu: 0.0.40
codegen_flags: <defaults>
</compile_context>

<pallas_src>
import jax
import jax.numpy as jnp
from jax import lax
from jax.experimental import pallas as pl
from jax.experimental.pallas import tpu as pltpu

LN_EPS = 1e-5


def _round_up(x, m):
    return (x + m - 1) // m * m


def _patch_merging_kernel(x_ref, w_ref, b_ref, o_ref):
    """Fused 2x2-merge LayerNorm(4C) + bias-free Linear(4C -> 2C).

    x_ref : (tr, 2, tw, 2C)  dim 1 is the h-parity; last dim packs
                             [w-even C | w-odd C] channels of a 2x2 window.
    w_ref : (2, 2C, C2p)     reduction weight (gamma pre-folded), parity split.
    b_ref : (1, C2p)         beta @ w, f32.
    o_ref : (tr, tw, C2p)
    """
    f32 = jnp.float32
    tr, _, tw, c2 = x_ref.shape            # c2 == 2*C
    c2p = o_ref.shape[-1]
    rows = tr * tw

    # h-even ([x0|x2]) and h-odd ([x1|x3]) halves of each 2x2 window.
    # tw is a multiple of 8 -> the (tr, tw) -> rows flatten is layout-free.
    xe = x_ref[:, 0, :, :].astype(f32).reshape(rows, c2)
    xo = x_ref[:, 1, :, :].astype(f32).reshape(rows, c2)

    # One-pass LayerNorm moments over the virtual 4C concat (split over parity).
    inv_c4 = 1.0 / (2.0 * c2)               # 1 / (4*C)
    s1 = jnp.sum(xe, axis=-1, keepdims=True) + jnp.sum(xo, axis=-1, keepdims=True)
    s2 = (jnp.sum(xe * xe, axis=-1, keepdims=True)
          + jnp.sum(xo * xo, axis=-1, keepdims=True))
    mean = s1 * inv_c4
    var = s2 * inv_c4 - mean * mean
    inv = lax.rsqrt(var + LN_EPS)
    shift = mean * inv                       # per-row scalar

    mm_dtype = w_ref.dtype                   # bf16 weights -> bf16 MXU operands
    ne = (xe * inv - shift).astype(mm_dtype)
    no = (xo * inv - shift).astype(mm_dtype)

    # Split-K reduction over the two h-parity halves; gamma/beta already folded.
    acc = jnp.dot(ne, w_ref[0], preferred_element_type=f32)
    acc = acc + jnp.dot(no, w_ref[1], preferred_element_type=f32)
    acc = acc + b_ref[...].astype(f32)
    o_ref[...] = acc.reshape(tr, tw, c2p).astype(o_ref.dtype)


def patch_merging(x, H, W, gamma, beta, w, *, target_tokens=8192):
    """Forward pass matching PatchMerging.forward.

    x: (B, H*W, C);  gamma, beta: (4C,);  w: (4C, 2C) (transposed vs nn.Linear)
    returns: (B, ceil(H/2)*ceil(W/2), 2C)
    """
    B, L, C = x.shape
    assert L == H * W, "input feature has wrong size"
    C4, C2 = w.shape
    assert C4 == 4 * C and C2 == 2 * C, "weight must be (4C, 2C)"
    f32 = jnp.float32

    Hp2 = (H + 1) // 2
    Wp2 = (W + 1) // 2

    # --- spatial view / padding ------------------------------------------
    # Parity pad matches F.pad.  The merged width is additionally rounded up to
    # a sublane multiple only when a pad pass is needed anyway (or Wp2 < 8);
    # otherwise the array keeps its natural width and an edge block absorbs it.
    if (H % 2) or (W % 2) or (Wp2 < 8):
        Wp2_eff = _round_up(max(Wp2, 8), 8)
    else:
        Wp2_eff = Wp2
    pad_h = 2 * Hp2 - H
    pad_w = 2 * Wp2_eff - W
    xv = x.reshape(B, H, W, C)
    if pad_h or pad_w:
        xv = jnp.pad(xv, ((0, 0), (0, pad_h), (0, pad_w), (0, 0)))

    # Free reshape: dim0 = flat (b, h2) row, dim1 = h-parity, last dim packs
    # [w-even C | w-odd C] channels of one merged 2x2 window.
    R = B * Hp2
    x4 = xv.reshape(R, 2, Wp2_eff, 2 * C)

    # --- parameters: fold the LN affine into the reduction ----------------
    C2p = 128 if C2 < 128 else C2            # lane-pad output only when 2C < 128
    w_eff = (w.astype(f32) * gamma.astype(f32)[:, None]).astype(w.dtype)
    bias = beta.astype(f32) @ w.astype(f32)  # (2C,), f32
    if C2p != C2:
        w_eff = jnp.pad(w_eff, ((0, 0), (0, C2p - C2)))
        bias = jnp.pad(bias, (0, C2p - C2))
    bias2 = bias.reshape(1, C2p)

    def _split(p):                           # (4C, N) -> (2, 2C, N)
        p = p.reshape(4, C, -1)
        return jnp.stack([jnp.concatenate([p[0], p[2]], axis=0),   # h-even: [x0|x2]
                          jnp.concatenate([p[1], p[3]], axis=0)],  # h-odd : [x1|x3]
                         axis=0)

    w2 = _split(w_eff)                       # (2, 2C, C2p)

    # --- tile sizing under a generation-aware VMEM budget ------------------
    in_sz = x.dtype.itemsize
    out_sz = x.dtype.itemsize
    mm_sz = w.dtype.itemsize
    param_bytes = w2.size * w2.dtype.itemsize + bias2.size * bias2.dtype.itemsize

    try:
        vmem_cap = int(pltpu.get_tpu_info().vmem_capacity_bytes)
    except Exception:
        vmem_cap = 64 << 20                  # conservative: v7x per-core VMEM
    budget_total = min(int(0.75 * vmem_cap), 96 << 20)
    # Constants budgeted as double-buffered (safe even if Buffered(1) is refused).
    tile_budget = max(budget_total - 2 * param_bytes - (2 << 20), 2 << 20)

    # bytes per merged token: double-buffered pipeline blocks + in-kernel
    # f32 / mm-dtype temporaries (xe/xo, ne/no, accumulator, cast output).
    pipe_per_token = 2 * (4 * C * in_sz + C2p * out_sz)
    work_per_token = 2 * (4 * C) * 4 + (4 * C) * mm_sz + 8 * C2p
    per_token = pipe_per_token + work_per_token

    # Width tile: full width when sublane-aligned, else the multiple-of-8 tile
    # minimizing processed-but-invalid columns (largest such tile).
    if Wp2_eff % 8 == 0:
        tw = Wp2_eff
    else:
        cands = range(8, (Wp2_eff // 8) * 8 + 1, 8)
        tw = min(cands, key=lambda t: (pl.cdiv(Wp2_eff, t) * t, -t))
    while tw > 8 and tw * per_token * 8 > tile_budget:
        tw -= 8                              # rare: one full-width row slab too big

    tr_cap = max(1, tile_budget // (tw * per_token))
    tr = max(1, min(max(1, target_tokens // tw), tr_cap, R))
    nw = pl.cdiv(Wp2_eff, tw)
    nr = pl.cdiv(R, tr)
    # Keep >= 4 (preferably even) grid steps so both v7x TensorCores get work.
    if nr * nw < 4 and R > 1:
        nr = min(R, pl.cdiv(4, nw))
        tr = pl.cdiv(R, nr)
        nr = pl.cdiv(R, tr)
    if (nr * nw) % 2 and nr < R:
        tr = pl.cdiv(R, nr + 1)
        nr = pl.cdiv(R, tr)

    vmem_need = tw * per_token * tr + 2 * param_bytes
    vmem_limit = int(min(max(vmem_need + (8 << 20), 32 << 20),
                         min(96 << 20, int(0.9 * vmem_cap))))

    n_tok = R * Wp2_eff
    cost = pl.CostEstimate(
        flops=2 * n_tok * (4 * C) * C2p,
        transcendentals=n_tok,
        bytes_accessed=n_tok * 4 * C * in_sz + n_tok * C2p * out_sz + param_bytes,
    )

    def _pallas(single_buffer_consts):
        const_kw = ({"pipeline_mode": pl.Buffered(1)} if single_buffer_consts else {})
        return pl.pallas_call(
            _patch_merging_kernel,
            out_shape=jax.ShapeDtypeStruct((R, Wp2_eff, C2p), x.dtype),
            grid_spec=pltpu.PrefetchScalarGridSpec(
                num_scalar_prefetch=0,
                grid=(nr, nw),
                in_specs=[
                    pl.BlockSpec((tr, 2, tw, 2 * C), lambda r, wb: (r, 0, wb, 0)),
                    pl.BlockSpec((2, C2, C2p), lambda r, wb: (0, 0, 0), **const_kw),
                    pl.BlockSpec((1, C2p), lambda r, wb: (0, 0), **const_kw),
                ],
                out_specs=pl.BlockSpec((tr, tw, C2p), lambda r, wb: (r, wb, 0)),
            ),
            compiler_params=pltpu.CompilerParams(
                dimension_semantics=("parallel", "parallel"),
                vmem_limit_bytes=vmem_limit,
            ),
            cost_estimate=cost,
        )(x4, w2, bias2)

    try:
        out3 = _pallas(True)
    except Exception:
        # Fallback: this JAX build rejects single-buffered constants; the VMEM
        # budget already accounts for double-buffering them.
        out3 = _pallas(False)

    out = out3.reshape(B, Hp2, Wp2_eff, C2p)
    if Wp2_eff != Wp2:
        out = out[:, :, :Wp2, :]
    if C2p != C2:
        out = out[..., :C2]
    return out.reshape(B, Hp2 * Wp2, C2)


def _reference(x, H, W, gamma, beta, w):
    """Pure-JAX reference (mirrors the PyTorch forward) for correctness checks."""
    B, L, C = x.shape
    xv = x.reshape(B, H, W, C)
    if (H % 2 == 1) or (W % 2 == 1):
        xv = jnp.pad(xv, ((0, 0), (0, H % 2), (0, W % 2), (0, 0)))
    x0 = xv[:, 0::2, 0::2, :]
    x1 = xv[:, 1::2, 0::2, :]
    x2 = xv[:, 0::2, 1::2, :]
    x3 = xv[:, 1::2, 1::2, :]
    xc = jnp.concatenate([x0, x1, x2, x3], axis=-1).reshape(B, -1, 4 * C)
    xf = xc.astype(jnp.float32)
    mean = jnp.mean(xf, axis=-1, keepdims=True)
    var = jnp.mean((xf - mean) ** 2, axis=-1, keepdims=True)
    xn = (xf - mean) * lax.rsqrt(var + LN_EPS) * gamma + beta
    return (xn @ w.astype(jnp.float32)).astype(x.dtype)


if __name__ == "__main__":
    key = jax.random.PRNGKey(0)
    kx, kw, kg, kb = jax.random.split(key, 4)

    def make_params(C, dtype=jnp.float32):
        fan_in, fan_out = 4 * C, 2 * C
        bound = (6.0 / (fan_in + fan_out)) ** 0.5          # xavier_uniform scale
        w = jax.random.uniform(kw, (fan_in, fan_out), jnp.float32, -bound, bound)
        gamma = 1.0 + 0.1 * jax.random.normal(kg, (fan_in,), jnp.float32)
        beta = 0.1 * jax.random.normal(kb, (fan_in,), jnp.float32)
        return w.astype(dtype), gamma, beta

    # 1) f32, even dims, sublane-aligned merged width (single full-width block).
    B, H, W, C = 2, 16, 16, 32
    w, gamma, beta = make_params(C)
    x = jax.random.normal(kx, (B, H * W, C), jnp.float32)
    out = jax.block_until_ready(patch_merging(x, H, W, gamma, beta, w))
    ref = _reference(x, H, W, gamma, beta, w)
    assert out.shape == (B, (H // 2) * (W // 2), 2 * C), out.shape
    assert jnp.allclose(out, ref, atol=1e-4, rtol=1e-4), "f32 mismatch"

    # 2) bf16 activations / weights: bf16 MXU operands, f32 LN + accumulation.
    xb, wb = x.astype(jnp.bfloat16), w.astype(jnp.bfloat16)
    outb = jax.block_until_ready(patch_merging(xb, H, W, gamma, beta, wb))
    refb = _reference(xb, H, W, gamma, beta, wb)
    assert outb.dtype == jnp.bfloat16
    assert jnp.allclose(outb.astype(jnp.float32), refb.astype(jnp.float32),
                        atol=5e-2, rtol=5e-2), "bf16 mismatch"

    # 3) odd H/W: exercises the F.pad path (width rounded up within the same pad).
    Ho, Wo = 15, 13
    xo = jax.random.normal(kx, (B, Ho * Wo, C), jnp.float32)
    outo = jax.block_until_ready(patch_merging(xo, Ho, Wo, gamma, beta, w))
    refo = _reference(xo, Ho, Wo, gamma, beta, w)
    assert outo.shape == (B, ((Ho + 1) // 2) * ((Wo + 1) // 2), 2 * C), outo.shape
    assert jnp.allclose(outo, refo, atol=1e-4, rtol=1e-4), "odd-shape mismatch"

    # 4) even dims, non-aligned merged width (Wp2=10 -> ragged edge block) and a
    #    2C >= 128 output written at its natural (unpadded) width.
    Hr, Wr, Cr = 12, 20, 80
    wr, gammar, betar = make_params(Cr)
    xr = jax.random.normal(kx, (B, Hr * Wr, Cr), jnp.float32)
    outr = jax.block_until_ready(patch_merging(xr, Hr, Wr, gammar, betar, wr))
    refr = _reference(xr, Hr, Wr, gammar, betar, wr)
    assert outr.shape == (B, (Hr // 2) * (Wr // 2), 2 * Cr), outr.shape
    assert jnp.allclose(outr, refr, atol=1e-4, rtol=1e-4), "ragged-width mismatch"

    print("KERNEL_OK")
</pallas_src>

<mosaic_0001>
module attributes {stable_mosaic.version = 11 : i64} {
  func.func @_patch_merging_kernel(%arg0: i32, %arg1: i32, %arg2: memref<4x2x8x64xf32, #tpu.memory_space<vmem>>, %arg3: memref<2x64x128xf32, #tpu.memory_space<vmem>>, %arg4: memref<1x128xf32, #tpu.memory_space<vmem>>, %arg5: memref<4x8x128xf32, #tpu.memory_space<vmem>>) attributes {dimension_semantics = [#tpu.dimension_semantics<parallel>, #tpu.dimension_semantics<parallel>], iteration_bounds = array<i64: 4, 1>, scalar_prefetch = 0 : i64, scratch_operands = 0 : i64, tpu.core_type = #tpu.core_type<tc>, window_params = [{transform_indices = @transform_0, window_bounds = array<i64: 4, 2, 8, 64>}, {pipeline_mode = #tpu.pipeline_mode<synchronous>, transform_indices = @transform_1, window_bounds = array<i64: 2, 64, 128>}, {pipeline_mode = #tpu.pipeline_mode<synchronous>, transform_indices = @transform_2, window_bounds = array<i64: 1, 128>}, {transform_indices = @transform_3, window_bounds = array<i64: 4, 8, 128>}]} {
    %c0 = arith.constant 0 : index
    %c0_0 = arith.constant 0 : index
    %c0_1 = arith.constant 0 : index
    %c0_2 = arith.constant 0 : index
    %0 = vector.load %arg2[%c0, %c0_0, %c0_1, %c0_2] : memref<4x2x8x64xf32, #tpu.memory_space<vmem>>, vector<4x1x8x64xf32>
    %1 = vector.shape_cast %0 : vector<4x1x8x64xf32> to vector<4x8x64xf32>
    %2 = vector.shape_cast %1 : vector<4x8x64xf32> to vector<32x64xf32>
    %c0_3 = arith.constant 0 : index
    %c1 = arith.constant 1 : index
    %c0_4 = arith.constant 0 : index
    %c0_5 = arith.constant 0 : index
    %3 = vector.load %arg2[%c0_3, %c1, %c0_4, %c0_5] : memref<4x2x8x64xf32, #tpu.memory_space<vmem>>, vector<4x1x8x64xf32>
    %4 = vector.shape_cast %3 : vector<4x1x8x64xf32> to vector<4x8x64xf32>
    %5 = vector.shape_cast %4 : vector<4x8x64xf32> to vector<32x64xf32>
    %cst = arith.constant dense<0.000000e+00> : vector<32xf32>
    %6 = vector.multi_reduction <add>, %2, %cst [1] : vector<32x64xf32> to vector<32xf32>
    %7 = vector.shape_cast %6 : vector<32xf32> to vector<32x1xf32>
    %cst_6 = arith.constant dense<0.000000e+00> : vector<32xf32>
    %8 = vector.multi_reduction <add>, %5, %cst_6 [1] : vector<32x64xf32> to vector<32xf32>
    %9 = vector.shape_cast %8 : vector<32xf32> to vector<32x1xf32>
    %10 = arith.addf %7, %9 : vector<32x1xf32>
    %11 = arith.mulf %2, %2 : vector<32x64xf32>
    %cst_7 = arith.constant dense<0.000000e+00> : vector<32xf32>
    %12 = vector.multi_reduction <add>, %11, %cst_7 [1] : vector<32x64xf32> to vector<32xf32>
    %13 = vector.shape_cast %12 : vector<32xf32> to vector<32x1xf32>
    %14 = arith.mulf %5, %5 : vector<32x64xf32>
    %cst_8 = arith.constant dense<0.000000e+00> : vector<32xf32>
    %15 = vector.multi_reduction <add>, %14, %cst_8 [1] : vector<32x64xf32> to vector<32xf32>
    %16 = vector.shape_cast %15 : vector<32xf32> to vector<32x1xf32>
    %17 = arith.addf %13, %16 : vector<32x1xf32>
    %cst_9 = arith.constant 7.812500e-03 : f32
    %18 = vector.broadcast %cst_9 : f32 to vector<32x1xf32>
    %19 = arith.mulf %10, %18 : vector<32x1xf32>
    %cst_10 = arith.constant 7.812500e-03 : f32
    %20 = vector.broadcast %cst_10 : f32 to vector<32x1xf32>
    %21 = arith.mulf %17, %20 : vector<32x1xf32>
    %22 = arith.mulf %19, %19 : vector<32x1xf32>
    %23 = arith.subf %21, %22 : vector<32x1xf32>
    %cst_11 = arith.constant 9.99999974E-6 : f32
    %24 = vector.broadcast %cst_11 : f32 to vector<32x1xf32>
    %25 = arith.addf %23, %24 : vector<32x1xf32>
    %26 = math.rsqrt %25 : vector<32x1xf32>
    %27 = arith.mulf %19, %26 : vector<32x1xf32>
    %28 = vector.broadcast %26 : vector<32x1xf32> to vector<32x64xf32>
    %29 = arith.mulf %2, %28 : vector<32x64xf32>
    %30 = vector.broadcast %27 : vector<32x1xf32> to vector<32x64xf32>
    %31 = arith.subf %29, %30 : vector<32x64xf32>
    %32 = vector.broadcast %26 : vector<32x1xf32> to vector<32x64xf32>
    %33 = arith.mulf %5, %32 : vector<32x64xf32>
    %34 = vector.broadcast %27 : vector<32x1xf32> to vector<32x64xf32>
    %35 = arith.subf %33, %34 : vector<32x64xf32>
    %c0_12 = arith.constant 0 : index
    %c0_13 = arith.constant 0 : index
    %c0_14 = arith.constant 0 : index
    %36 = vector.load %arg3[%c0_12, %c0_13, %c0_14] : memref<2x64x128xf32, #tpu.memory_space<vmem>>, vector<1x64x128xf32>
    %37 = vector.shape_cast %36 : vector<1x64x128xf32> to vector<64x128xf32>
    %cst_15 = arith.constant dense<0.000000e+00> : vector<32x128xf32>
    %38 = tpu.matmul %31, %37, %cst_15 {dimension_numbers = #tpu.dot_dimension_numbers<[1], [0], [0], [1], [0, 0, 1, 1], [], []>} : vector<32x64xf32>, vector<64x128xf32>, vector<32x128xf32> -> vector<32x128xf32>
    %c1_16 = arith.constant 1 : index
    %c0_17 = arith.constant 0 : index
    %c0_18 = arith.constant 0 : index
    %39 = vector.load %arg3[%c1_16, %c0_17, %c0_18] : memref<2x64x128xf32, #tpu.memory_space<vmem>>, vector<1x64x128xf32>
    %40 = vector.shape_cast %39 : vector<1x64x128xf32> to vector<64x128xf32>
    %cst_19 = arith.constant dense<0.000000e+00> : vector<32x128xf32>
    %41 = tpu.matmul %35, %40, %cst_19 {dimension_numbers = #tpu.dot_dimension_numbers<[1], [0], [0], [1], [0, 0, 1, 1], [], []>} : vector<32x64xf32>, vector<64x128xf32>, vector<32x128xf32> -> vector<32x128xf32>
    %42 = arith.addf %38, %41 : vector<32x128xf32>
    %c0_20 = arith.constant 0 : index
    %c0_21 = arith.constant 0 : index
    %43 = vector.load %arg4[%c0_20, %c0_21] : memref<1x128xf32, #tpu.memory_space<vmem>>, vector<1x128xf32>
    %44 = vector.broadcast %43 : vector<1x128xf32> to vector<32x128xf32>
    %45 = arith.addf %42, %44 : vector<32x128xf32>
    %46 = vector.shape_cast %45 : vector<32x128xf32> to vector<4x8x128xf32>
    %c0_22 = arith.constant 0 : index
    %c0_23 = arith.constant 0 : index
    %c0_24 = arith.constant 0 : index
    %47 = vector.load %arg5[%c0_22, %c0_23, %c0_24] : memref<4x8x128xf32, #tpu.memory_space<vmem>>, vector<4x8x128xf32>
    tpu.vector_store %arg5[%c0_22, %c0_23, %c0_24], %46 {strides = array<i32>} : memref<4x8x128xf32, #tpu.memory_space<vmem>>, vector<4x8x128xf32>,
    return
  }
  func.func @transform_0(%arg0: i32, %arg1: i32) -> (i32, i32, i32, i32) {
    %c0_i32 = arith.constant 0 : i32
    %c0_i32_0 = arith.constant 0 : i32
    %c0_i32_1 = arith.constant 0 : i32
    return %arg0, %c0_i32, %arg1, %c0_i32_0 : i32, i32, i32, i32
  }
  func.func @transform_1(%arg0: i32, %arg1: i32) -> (i32, i32, i32) {
    %c0_i32 = arith.constant 0 : i32
    %c0_i32_0 = arith.constant 0 : i32
    %c0_i32_1 = arith.constant 0 : i32
    %c0_i32_2 = arith.constant 0 : i32
    return %c0_i32, %c0_i32_0, %c0_i32_1 : i32, i32, i32
  }
  func.func @transform_2(%arg0: i32, %arg1: i32) -> (i32, i32) {
    %c0_i32 = arith.constant 0 : i32
    %c0_i32_0 = arith.constant 0 : i32
    %c0_i32_1 = arith.constant 0 : i32
    return %c0_i32, %c0_i32_0 : i32, i32
  }
  func.func @transform_3(%arg0: i32, %arg1: i32) -> (i32, i32, i32) {
    %c0_i32 = arith.constant 0 : i32
    %c0_i32_0 = arith.constant 0 : i32
    return %arg0, %arg1, %c0_i32 : i32, i32, i32
  }
}

module attributes {stable_mosaic.version = 11 : i64} {
  func.func @_patch_merging_kernel(%arg0: i32, %arg1: i32, %arg2: memref<4x2x8x64xf32, #tpu.memory_space<vmem>>, %arg3: memref<2x64x128xf32, #tpu.memory_space<vmem>>, %arg4: memref<1x128xf32, #tpu.memory_space<vmem>>, %arg5: memref<4x8x128xf32, #tpu.memory_space<vmem>>) attributes {dimension_semantics = [#tpu.dimension_semantics<parallel>, #tpu.dimension_semantics<parallel>], iteration_bounds = array<i64: 4, 1>, scalar_prefetch = 0 : i64, scratch_operands = 0 : i64, tpu.core_type = #tpu.core_type<tc>, window_params = [{transform_indices = @transform_0, window_bounds = array<i64: 4, 2, 8, 64>}, {pipeline_mode = #tpu.pipeline_mode<synchronous>, transform_indices = @transform_1, window_bounds = array<i64: 2, 64, 128>}, {pipeline_mode = #tpu.pipeline_mode<synchronous>, transform_indices = @transform_2, window_bounds = array<i64: 1, 128>}, {transform_indices = @transform_3, window_bounds = array<i64: 4, 8, 128>}]} {
    %c0 = arith.constant 0 : index
    %c0_0 = arith.constant 0 : index
    %c0_1 = arith.constant 0 : index
    %c0_2 = arith.constant 0 : index
    %0 = vector.load %arg2[%c0, %c0_0, %c0_1, %c0_2] : memref<4x2x8x64xf32, #tpu.memory_space<vmem>>, vector<4x1x8x64xf32>
    %1 = vector.shape_cast %0 : vector<4x1x8x64xf32> to vector<4x8x64xf32>
    %2 = vector.shape_cast %1 : vector<4x8x64xf32> to vector<32x64xf32>
    %c0_3 = arith.constant 0 : index
    %c1 = arith.constant 1 : index
    %c0_4 = arith.constant 0 : index
    %c0_5 = arith.constant 0 : index
    %3 = vector.load %arg2[%c0_3, %c1, %c0_4, %c0_5] : memref<4x2x8x64xf32, #tpu.memory_space<vmem>>, vector<4x1x8x64xf32>
    %4 = vector.shape_cast %3 : vector<4x1x8x64xf32> to vector<4x8x64xf32>
    %5 = vector.shape_cast %4 : vector<4x8x64xf32> to vector<32x64xf32>
    %cst = arith.constant dense<0.000000e+00> : vector<32xf32>
    %6 = vector.multi_reduction <add>, %2, %cst [1] : vector<32x64xf32> to vector<32xf32>
    %7 = vector.shape_cast %6 : vector<32xf32> to vector<32x1xf32>
    %cst_6 = arith.constant dense<0.000000e+00> : vector<32xf32>
    %8 = vector.multi_reduction <add>, %5, %cst_6 [1] : vector<32x64xf32> to vector<32xf32>
    %9 = vector.shape_cast %8 : vector<32xf32> to vector<32x1xf32>
    %10 = arith.addf %7, %9 : vector<32x1xf32>
    %11 = arith.mulf %2, %2 : vector<32x64xf32>
    %cst_7 = arith.constant dense<0.000000e+00> : vector<32xf32>
    %12 = vector.multi_reduction <add>, %11, %cst_7 [1] : vector<32x64xf32> to vector<32xf32>
    %13 = vector.shape_cast %12 : vector<32xf32> to vector<32x1xf32>
    %14 = arith.mulf %5, %5 : vector<32x64xf32>
    %cst_8 = arith.constant dense<0.000000e+00> : vector<32xf32>
    %15 = vector.multi_reduction <add>, %14, %cst_8 [1] : vector<32x64xf32> to vector<32xf32>
    %16 = vector.shape_cast %15 : vector<32xf32> to vector<32x1xf32>
    %17 = arith.addf %13, %16 : vector<32x1xf32>
    %cst_9 = arith.constant 7.812500e-03 : f32
    %18 = vector.broadcast %cst_9 : f32 to vector<32x1xf32>
    %19 = arith.mulf %10, %18 : vector<32x1xf32>
    %cst_10 = arith.constant 7.812500e-03 : f32
    %20 = vector.broadcast %cst_10 : f32 to vector<32x1xf32>
    %21 = arith.mulf %17, %20 : vector<32x1xf32>
    %22 = arith.mulf %19, %19 : vector<32x1xf32>
    %23 = arith.subf %21, %22 : vector<32x1xf32>
    %cst_11 = arith.constant 9.99999974E-6 : f32
    %24 = vector.broadcast %cst_11 : f32 to vector<32x1xf32>
    %25 = arith.addf %23, %24 : vector<32x1xf32>
    %26 = math.rsqrt %25 : vector<32x1xf32>
    %27 = arith.mulf %19, %26 : vector<32x1xf32>
    %28 = vector.broadcast %26 : vector<32x1xf32> to vector<32x64xf32>
    %29 = arith.mulf %2, %28 : vector<32x64xf32>
    %30 = vector.broadcast %27 : vector<32x1xf32> to vector<32x64xf32>
    %31 = arith.subf %29, %30 : vector<32x64xf32>
    %32 = vector.broadcast %26 : vector<32x1xf32> to vector<32x64xf32>
    %33 = arith.mulf %5, %32 : vector<32x64xf32>
    %34 = vector.broadcast %27 : vector<32x1xf32> to vector<32x64xf32>
    %35 = arith.subf %33, %34 : vector<32x64xf32>
    %c0_12 = arith.constant 0 : index
    %c0_13 = arith.constant 0 : index
    %c0_14 = arith.constant 0 : index
    %36 = vector.load %arg3[%c0_12, %c0_13, %c0_14] : memref<2x64x128xf32, #tpu.memory_space<vmem>>, vector<1x64x128xf32>
    %37 = vector.shape_cast %36 : vector<1x64x128xf32> to vector<64x128xf32>
    %cst_15 = arith.constant dense<0.000000e+00> : vector<32x128xf32>
    %38 = tpu.matmul %31, %37, %cst_15 {dimension_numbers = #tpu.dot_dimension_numbers<[1], [0], [0], [1], [0, 0, 1, 1], [], []>} : vector<32x64xf32>, vector<64x128xf32>, vector<32x128xf32> -> vector<32x128xf32>
    %c1_16 = arith.constant 1 : index
    %c0_17 = arith.constant 0 : index
    %c0_18 = arith.constant 0 : index
    %39 = vector.load %arg3[%c1_16, %c0_17, %c0_18] : memref<2x64x128xf32, #tpu.memory_space<vmem>>, vector<1x64x128xf32>
    %40 = vector.shape_cast %39 : vector<1x64x128xf32> to vector<64x128xf32>
    %cst_19 = arith.constant dense<0.000000e+00> : vector<32x128xf32>
    %41 = tpu.matmul %35, %40, %cst_19 {dimension_numbers = #tpu.dot_dimension_numbers<[1], [0], [0], [1], [0, 0, 1, 1], [], []>} : vector<32x64xf32>, vector<64x128xf32>, vector<32x128xf32> -> vector<32x128xf32>
    %42 = arith.addf %38, %41 : vector<32x128xf32>
    %c0_20 = arith.constant 0 : index
    %c0_21 = arith.constant 0 : index
    %43 = vector.load %arg4[%c0_20, %c0_21] : memref<1x128xf32, #tpu.memory_space<vmem>>, vector<1x128xf32>
    %44 = vector.broadcast %43 : vector<1x128xf32> to vector<32x128xf32>
    %45 = arith.addf %42, %44 : vector<32x128xf32>
    %46 = vector.shape_cast %45 : vector<32x128xf32> to vector<4x8x128xf32>
    %c0_22 = arith.constant 0 : index
    %c0_23 = arith.constant 0 : index
    %c0_24 = arith.constant 0 : index
    %47 = vector.load %arg5[%c0_22, %c0_23, %c0_24] : memref<4x8x128xf32, #tpu.memory_space<vmem>>, vector<4x8x128xf32>
    tpu.vector_store %arg5[%c0_22, %c0_23, %c0_24], %46 {strides = array<i32>} : memref<4x8x128xf32, #tpu.memory_space<vmem>>, vector<4x8x128xf32>,
    return
  }
  func.func @transform_0(%arg0: i32, %arg1: i32) -> (i32, i32, i32, i32) {
    %c0_i32 = arith.constant 0 : i32
    %c0_i32_0 = arith.constant 0 : i32
    %c0_i32_1 = arith.constant 0 : i32
    return %arg0, %c0_i32, %arg1, %c0_i32_0 : i32, i32, i32, i32
  }
  func.func @transform_1(%arg0: i32, %arg1: i32) -> (i32, i32, i32) {
    %c0_i32 = arith.constant 0 : i32
    %c0_i32_0 = arith.constant 0 : i32
    %c0_i32_1 = arith.constant 0 : i32
    %c0_i32_2 = arith.constant 0 : i32
    return %c0_i32, %c0_i32_0, %c0_i32_1 : i32, i32, i32
  }
  func.func @transform_2(%arg0: i32, %arg1: i32) -> (i32, i32) {
    %c0_i32 = arith.constant 0 : i32
    %c0_i32_0 = arith.constant 0 : i32
    %c0_i32_1 = arith.constant 0 : i32
    return %c0_i32, %c0_i32_0 : i32, i32
  }
  func.func @transform_3(%arg0: i32, %arg1: i32) -> (i32, i32, i32) {
    %c0_i32 = arith.constant 0 : i32
    %c0_i32_0 = arith.constant 0 : i32
    return %arg0, %arg1, %c0_i32 : i32, i32, i32
  }
}

</mosaic_0001>

<llo_original>
// kernel: tpu_custom_call.1
$region0: #{tpu_custom_call.1}
  #allocation0 [shape = 'u32[]', space=smem, size = 0x4, offset = 0x4, fixed_abs, tag = 'smem constant byte address 0x4 - core index']
  #allocation1 [shape = 'u32[72,128]{1,0:T(1,128)}', space=vmem, size = 0x9000, scoped, tag = 'internal scratch']
  %s0 = inlined_call_operand.hbm [shape: f32[16,2,8,64], index: 0, kind: input, shape index: {}]
  %s1 = inlined_call_operand.hbm [shape: f32[2,64,128], index: 1, kind: input, shape index: {}]
  %s2 = inlined_call_operand.vmem [shape: f32[1,128], index: 2, kind: input, shape index: {}]
  %s3 = inlined_call_operand.hbm [shape: f32[16,8,128], index: 3, kind: output, shape index: {}]
  %s4 = sld [smem:[#allocation0]]
  $region53: #{tpu_custom_call.1} parent=0
    _
  %s6 = ssub.s32 1, %s4
  %s7 = scalar_select 0, %s6, %s4
  $region1: #{tpu_custom_call.1} parent=0
    #allocation2 [shape = 'u8[65536]{0}', space=vmem, size = 0x10000, scoped, tag = 'input window, operand 0']
    #allocation3 [shape = 's32[2]{0}', space=sflag, size = 0x8, scoped, tag = 'scoped memory for tpu_custom_call.1']
    #allocation4 [shape = 's32[2]{0}', space=sflag, size = 0x8, scoped, tag = 'scoped memory for tpu_custom_call.1']
    #allocation5 [shape = 'u8[65536]{0}', space=vmem, size = 0x10000, scoped, tag = 'input window, operand 1, single buffered']
    #allocation6 [shape = 's32[1]{0}', space=sflag, size = 0x4, scoped, tag = 'scoped memory for tpu_custom_call.1']
    #allocation7 [shape = 'u8[32768]{0}', space=vmem, size = 0x8000, scoped, tag = 'output window, operand 0']
    %8 = vsyncpa [#allocation3], 0
    %s9 = scalar_lea.sflag [#allocation3], 1
    %10 = vsyncpa %s9, 0
    %11 = vsyncpa [#allocation6], 0
    %12 = vsyncpa [#allocation4], 0
    %s13 = scalar_lea.sflag [#allocation4], 1
    %14 = vsyncpa %s13, 0
    loop: start=0, step=1, limit=6
    $region2: #{tpu_custom_call.1} parent=1 // loop_pre_header
      _
    $region3: #{tpu_custom_call.1} parent=1 // loop_header
      %s16 = sphi 0, %s20
      %p17 = scmp.ge.s32.totalorder %s16, 6
      %s23 = sphi 0, %s35
      %s24 = sphi 0, %s31
      %s25 = sphi 0, %s23
      %s26 = sphi 0, %s24
      %s27 = sphi 0, %s25
      %s28 = sphi 0, %s26
      %s40 = sphi 0, %s42
      %s43 = sphi 0, %s40
      %s44 = sphi 0, %s43
      %s60 = sphi 0, %s44
      %s64 = sphi 0, %s64
      %s66 = sphi 0, %s64
      %s67 = sphi 0, %s66
      %s81 = sphi 0, %s67
      %s85 = sphi 0, %s85
      %s87 = sphi 0, %s85
      %s88 = sphi 0, %s87
      %s102 = sphi 0, %s88
      %s110 = sphi 0, %s112
      %s113 = sphi 0, %s110
      %s114 = sphi 0, %s113
      %s130 = sphi 0, %s114
    $region4: #{tpu_custom_call.1} parent=1 // loop_header_branch
      %19 = sbr.rel (%p17) target = $region8
    $region5: #{tpu_custom_call.1} parent=1 // loop_body
      %s21 = ssub.s32 %s16, 1
      %s22 = ssub.s32 %s16, 2
      %s29 = sadd.s32 1, %s24
      %p30 = scmp.ge.s32.totalorder %s29, 1
      %s31 = scalar_select %p30, 0, %s29
      %s32 = sadd.s32 1, %s23
      %s33 = scalar_select %p30, %s32, %s23
      %p34 = scmp.ge.s32.totalorder %s33, 4
      %s35 = scalar_select %p34, 0, %s33
      %s36 = ssub.s32 %s23, %s35
      %s37 = ssub.s32 %s24, %s31
      %s38 = sor.u32 %s36, %s37
      %p39 = scmp.eq.s32.totalorder %s38, 0
      %s41 = sadd.s32 %s40, 1
      %s42 = scalar_select %p39, %s40, %s41
      %p45 = pneg %p39
      %p46 = scmp.eq.s32.totalorder %s16, 3
      %p47 = por %p45, %p46
      %p48 = scmp.ne.s32.totalorder %s40, %s43
      %p49 = scmp.eq.s32.totalorder %s16, 0
      %p50 = por %p48, %p49
      %p51 = scmp.ne.s32.totalorder %s40, %s43
      %p52 = scmp.eq.s32.totalorder %s21, 3
      %p53 = por %p51, %p52
      %p54 = scmp.ne.s32.totalorder %s43, %s44
      %p55 = scmp.eq.s32.totalorder %s21, 0
      %p56 = por %p54, %p55
      %p57 = scmp.ne.s32.totalorder %s43, %s44
      %p58 = scmp.eq.s32.totalorder %s22, 3
      %p59 = por %p57, %p58
      %p61 = scmp.ne.s32.totalorder %s44, %s60
      %p62 = scmp.eq.s32.totalorder %s22, 0
      %p63 = por %p61, %p62
      %s65 = sadd.s32 %s64, 1
      %p68 = scmp.eq.s32.totalorder %s16, 3
      %p69 = scmp.ne.s32.totalorder %s64, %s66
      %p70 = scmp.eq.s32.totalorder %s16, 0
      %p71 = por %p69, %p70
      %p72 = scmp.ne.s32.totalorder %s64, %s66
      %p73 = scmp.eq.s32.totalorder %s21, 3
      %p74 = por %p72, %p73
      %p75 = scmp.ne.s32.totalorder %s66, %s67
      %p76 = scmp.eq.s32.totalorder %s21, 0
      %p77 = por %p75, %p76
      %p78 = scmp.ne.s32.totalorder %s66, %s67
      %p79 = scmp.eq.s32.totalorder %s22, 3
      %p80 = por %p78, %p79
      %p82 = scmp.ne.s32.totalorder %s67, %s81
      %p83 = scmp.eq.s32.totalorder %s22, 0
      %p84 = por %p82, %p83
      %s86 = sadd.s32 %s85, 1
      %p89 = scmp.eq.s32.totalorder %s16, 3
      %p90 = scmp.ne.s32.totalorder %s85, %s87
      %p91 = scmp.eq.s32.totalorder %s16, 0
      %p92 = por %p90, %p91
      %p93 = scmp.ne.s32.totalorder %s85, %s87
      %p94 = scmp.eq.s32.totalorder %s21, 3
      %p95 = por %p93, %p94
      %p96 = scmp.ne.s32.totalorder %s87, %s88
      %p97 = scmp.eq.s32.totalorder %s21, 0
      %p98 = por %p96, %p97
      %p99 = scmp.ne.s32.totalorder %s87, %s88
      %p100 = scmp.eq.s32.totalorder %s22, 3
      %p101 = por %p99, %p100
      %p103 = scmp.ne.s32.totalorder %s88, %s102
      %p104 = scmp.eq.s32.totalorder %s22, 0
      %p105 = por %p103, %p104
      %s106 = ssub.s32 %s23, %s35
      %s107 = ssub.s32 %s24, %s31
      %s108 = sor.u32 %s106, %s107
      %p109 = scmp.eq.s32.totalorder %s108, 0
      %s111 = sadd.s32 %s110, 1
      %s112 = scalar_select %p109, %s110, %s111
      %p115 = pneg %p109
      %p116 = scmp.eq.s32.totalorder %s16, 3
      %p117 = por %p115, %p116
      %p118 = scmp.ne.s32.totalorder %s110, %s113
      %p119 = scmp.eq.s32.totalorder %s16, 0
      %p120 = por %p118, %p119
      %p121 = scmp.ne.s32.totalorder %s110, %s113
      %p122 = scmp.eq.s32.totalorder %s21, 3
      %p123 = por %p121, %p122
      %p124 = scmp.ne.s32.totalorder %s113, %s114
      %p125 = scmp.eq.s32.totalorder %s21, 0
      %p126 = por %p124, %p125
      %p127 = scmp.ne.s32.totalorder %s113, %s114
      %p128 = scmp.eq.s32.totalorder %s22, 3
      %p129 = por %p127, %p128
      %p131 = scmp.ne.s32.totalorder %s114, %s130
      %p132 = scmp.eq.s32.totalorder %s22, 0
      %p133 = por %p131, %p132
      %p134 = scmp.le.s32.totalorder 1, %s16
      %p135 = scmp.lt.s32.totalorder %s16, 5
      %p136 = pnand %p134, %p135
      %p137 = pneg %p136
      // Predicated region
      $region9: #{tpu_custom_call.1} parent=5 // pred_check
        _
      $region10: #{tpu_custom_call.1} parent=5 // pred_check_branch
        %139 = sbr.rel (%p136) target = $region12
      $region11: #{tpu_custom_call.1} parent=5 // pred_region
        %s140 = ssub.s32 %s16, 1
        // Predicated region
        $region13: #{tpu_custom_call.1} parent=11 // pred_check
          %p141 = pneg %p77
        $region14: #{tpu_custom_call.1} parent=11 // pred_check_branch
          %143 = sbr.rel (%p141) target = $region16
        $region15: #{tpu_custom_call.1} parent=11 // pred_region
          %145 = vsyncadd [#allocation6], 0
          %s146 = sshll.u32 %s1, 4
          %s147 = int_to_ptr.hbm [resolvable:$true] %s146
          %s148 = sshll.u32 [#allocation5], 4
          %s149 = int_to_ptr.vmem [resolvable:$true] %s148
          %154 = dma.hbm_to_vmem [thread:$0]  %s147, 2048, %s149, [#allocation6], 128, 128, 8
        $region16: #{tpu_custom_call.1} parent=11 // pred_fallthru
          _
        // Predicated region
        $region17: #{tpu_custom_call.1} parent=11 // pred_check
          %p155 = pneg %p98
        $region18: #{tpu_custom_call.1} parent=11 // pred_check_branch
          %157 = sbr.rel (%p155) target = $region20
        $region19: #{tpu_custom_call.1} parent=11 // pred_region
          _
        $region20: #{tpu_custom_call.1} parent=11 // pred_fallthru
          _
      $region12: #{tpu_custom_call.1} parent=5 // pred_fallthru
        _
      %p158 = scmp.lt.s32.totalorder %s16, 4
      // Predicated region
      $region21: #{tpu_custom_call.1} parent=5 // pred_check
        %p159 = pneg %p158
      $region22: #{tpu_custom_call.1} parent=5 // pred_check_branch
        %161 = sbr.rel (%p159) target = $region24
      $region23: #{tpu_custom_call.1} parent=5 // pred_region
        // Predicated region
        $region25: #{tpu_custom_call.1} parent=23 // pred_check
          %p162 = pneg %p50
        $region26: #{tpu_custom_call.1} parent=23 // pred_check_branch
          %164 = sbr.rel (%p162) target = $region28
        $region27: #{tpu_custom_call.1} parent=23 // pred_region
          %s165 = sand.u32 %s40, 1
          %s166 = scalar_lea.sflag [#allocation3], %s165
          %s167 = sand.u32 %s40, 1
          %s168 = smul.addr %s167, 64
          %s169 = scalar_lea.vmem [#allocation2], %s168
          %s170 = smul.u32 4, %s23
          %172 = vsyncadd %s166, 0
          %s173 = smul.addr %s170, 2
          %s174 = sadd.s32 %s24, %s173
          %s175 = smul.addr %s174, 8
          %s176 = scalar_lea.hbm %s0, %s175
          %s177 = sshll.u32 %s176, 4
          %s178 = int_to_ptr.hbm [resolvable:$true] %s177
          %s179 = sshll.u32 %s169, 4
          %s180 = int_to_ptr.vmem [resolvable:$true] %s179
          %185 = dma.hbm_to_vmem [thread:$0]  %s178, 1024, %s180, %s166, 128, 128, 8
        $region28: #{tpu_custom_call.1} parent=23 // pred_fallthru
          _
      $region24: #{tpu_custom_call.1} parent=5 // pred_fallthru
        _
      %p186 = scmp.le.s32.totalorder 1, %s16
      %p187 = scmp.lt.s32.totalorder %s16, 5
      %p188 = pnand %p186, %p187
      %p189 = pneg %p188
      // Predicated region
      $region29: #{tpu_custom_call.1} parent=5 // pred_check
        _
      $region30: #{tpu_custom_call.1} parent=5 // pred_check_branch
        %191 = sbr.rel (%p188) target = $region32
      $region31: #{tpu_custom_call.1} parent=5 // pred_region
        %s192 = ssub.s32 %s16, 1
        %s193 = sand.u32 %s43, 1
        %s194 = scalar_lea.sflag [#allocation3], %s193
        %s195 = sand.u32 %s43, 1
        %s196 = smul.addr %s195, 64
        %s197 = scalar_lea.vmem [#allocation2], %s196
        // Predicated region
        $region33: #{tpu_custom_call.1} parent=31 // pred_check
          %p198 = pneg %p56
        $region34: #{tpu_custom_call.1} parent=31 // pred_check_branch
          %200 = sbr.rel (%p198) target = $region36
        $region35: #{tpu_custom_call.1} parent=31 // pred_region
          %202 = dma.done %s194, 1024
        $region36: #{tpu_custom_call.1} parent=31 // pred_fallthru
          _
        // Predicated region
        $region37: #{tpu_custom_call.1} parent=31 // pred_check
          %p203 = pneg %p77
        $region38: #{tpu_custom_call.1} parent=31 // pred_check_branch
          %205 = sbr.rel (%p203) target = $region40
        $region39: #{tpu_custom_call.1} parent=31 // pred_region
          %207 = dma.done [#allocation6], 2048
        $region40: #{tpu_custom_call.1} parent=31 // pred_fallthru
          _
        %s208 = sand.u32 %s43, 1
        %s209 = scalar_lea.sflag [#allocation3], %s208
        %s210 = sand.u32 %s43, 1
        %s211 = smul.addr %s210, 64
        %s212 = scalar_lea.vmem [#allocation2], %s211
        %p213 = pneg %p56
        %p214 = pneg %p53
        %p215 = pneg %p77
        %p216 = pneg %p74
        %p217 = pneg %p98
        %p218 = pneg %p95
        %p219 = pneg %p126
        %p220 = pneg %p123
        %s221 = sand.u32 %s113, 1
        %s222 = scalar_lea.sflag [#allocation4], %s221
        %s223 = sand.u32 %s113, 1
        %s224 = smul.addr %s223, 32
        %s225 = scalar_lea.vmem [#allocation7], %s224
        %s226 = smul.u32 4, %s25
        %s227 = smul.u32 4, %s25
        %v228 = vld [vmem:[%s197] sm:$0xff]
        %v229 = vld [vmem:[%s197 + $0x10] sm:$0xff]
        %v230 = vld [vmem:[%s197 + $0x20] sm:$0xff]
        %v231 = vld [vmem:[%s197 + $0x30] sm:$0xff]
        %s232 = scalar_lea.vmem %s197, 8 [#allocation2]
        %v233 = vld [vmem:[%s232] sm:$0xff]
        %v234 = vld [vmem:[%s232 + $0x10] sm:$0xff]
        %v235 = vld [vmem:[%s232 + $0x20] sm:$0xff]
        %v236 = vld [vmem:[%s232 + $0x30] sm:$0xff]
        %vm237 = vcmask 523264
        %v238 = vsel %vm237, %v228, 0.0
        %239 = vadd.xlane.f32.xlu0 %v238
        %v240 = vpop.xlane.xlu0 %239
        %v241 = vsel %vm237, %v229, 0.0
        %242 = vadd.xlane.f32.xlu0 %v241
        %v243 = vpop.xlane.xlu0 %242
        %v244 = vsel %vm237, %v230, 0.0
        %245 = vadd.xlane.f32.xlu0 %v244
        %v246 = vpop.xlane.xlu0 %245
        %v247 = vsel %vm237, %v231, 0.0
        %248 = vadd.xlane.f32.xlu0 %v247
        %v249 = vpop.xlane.xlu0 %248
        %v250 = vsel %vm237, %v233, 0.0
        %251 = vadd.xlane.f32.xlu0 %v250
        %v252 = vpop.xlane.xlu0 %251
        %v253 = vsel %vm237, %v234, 0.0
        %254 = vadd.xlane.f32.xlu0 %v253
        %v255 = vpop.xlane.xlu0 %254
        %v256 = vsel %vm237, %v235, 0.0
        %257 = vadd.xlane.f32.xlu0 %v256
        %v258 = vpop.xlane.xlu0 %257
        %v259 = vsel %vm237, %v236, 0.0
        %260 = vadd.xlane.f32.xlu0 %v259
        %v261 = vpop.xlane.xlu0 %260
        %v262 = vadd.f32 %v240, %v252
        %v263 = vadd.f32 %v243, %v255
        %v264 = vadd.f32 %v246, %v258
        %v265 = vadd.f32 %v249, %v261
        %v266 = vmul.f32 %v228, %v228
        %v267 = vmul.f32 %v229, %v229
        %v268 = vmul.f32 %v230, %v230
        %v269 = vmul.f32 %v231, %v231
        %v270 = vsel %vm237, %v266, 0.0
        %271 = vadd.xlane.f32.xlu0 %v270
        %v272 = vpop.xlane.xlu0 %271
        %v273 = vsel %vm237, %v267, 0.0
        %274 = vadd.xlane.f32.xlu0 %v273
        %v275 = vpop.xlane.xlu0 %274
        %v276 = vsel %vm237, %v268, 0.0
        %277 = vadd.xlane.f32.xlu0 %v276
        %v278 = vpop.xlane.xlu0 %277
        %v279 = vsel %vm237, %v269, 0.0
        %280 = vadd.xlane.f32.xlu0 %v279
        %v281 = vpop.xlane.xlu0 %280
        %v282 = vmul.f32 %v233, %v233
        %v283 = vmul.f32 %v234, %v234
        %v284 = vmul.f32 %v235, %v235
        %v285 = vmul.f32 %v236, %v236
        %v286 = vsel %vm237, %v282, 0.0
        %287 = vadd.xlane.f32.xlu0 %v286
        %v288 = vpop.xlane.xlu0 %287
        %v289 = vsel %vm237, %v283, 0.0
        %290 = vadd.xlane.f32.xlu0 %v289
        %v291 = vpop.xlane.xlu0 %290
        %v292 = vsel %vm237, %v284, 0.0
        %293 = vadd.xlane.f32.xlu0 %v292
        %v294 = vpop.xlane.xlu0 %293
        %v295 = vsel %vm237, %v285, 0.0
        %296 = vadd.xlane.f32.xlu0 %v295
        %v297 = vpop.xlane.xlu0 %296
        %v298 = vadd.f32 %v272, %v288
        %v299 = vadd.f32 %v275, %v291
        %v300 = vadd.f32 %v278, %v294
        %v301 = vadd.f32 %v281, %v297
        %v302 = vmul.f32 %v262, 0.0078125
        %v303 = vmul.f32 %v263, 0.0078125
        %v304 = vmul.f32 %v264, 0.0078125
        %v305 = vmul.f32 %v265, 0.0078125
        %v306 = vmul.f32 %v298, 0.0078125
        %v307 = vmul.f32 %v299, 0.0078125
        %v308 = vmul.f32 %v300, 0.0078125
        %v309 = vmul.f32 %v301, 0.0078125
        %v310 = vmul.f32 %v302, %v302
        %v311 = vmul.f32 %v303, %v303
        %v312 = vmul.f32 %v304, %v304
        %v313 = vmul.f32 %v305, %v305
        %v314 = vsub.f32 %v306, %v310
        %v315 = vsub.f32 %v307, %v311
        %v316 = vsub.f32 %v308, %v312
        %v317 = vsub.f32 %v309, %v313
        %v318 = vadd.f32 %v314, 1e-05
        %v319 = vadd.f32 %v315, 1e-05
        %v320 = vadd.f32 %v316, 1e-05
        %v321 = vadd.f32 %v317, 1e-05
        %v322 = vrsqrt.pop %v318
        %v323 = vmul.f32 %v322, %v318
        %v324 = vmul.f32 %v323, %v322
        %v325 = vmul.f32 0.5, %v324
        %v326 = vsub.f32 1.5, %v325
        %v327 = vmul.f32 %v322, %v326
        %vm328 = vweird.f32 %v318
        %vm329 = vweird.f32 %v322
        %vm330 = vmor %vm328, %vm329
        %v331 = vsel %vm330, %v322, %v327
        %v332 = vrsqrt.pop %v319
        %v333 = vmul.f32 %v332, %v319
        %v334 = vmul.f32 %v333, %v332
        %v335 = vmul.f32 0.5, %v334
        %v336 = vsub.f32 1.5, %v335
        %v337 = vmul.f32 %v332, %v336
        %vm338 = vweird.f32 %v319
        %vm339 = vweird.f32 %v332
        %vm340 = vmor %vm338, %vm339
        %v341 = vsel %vm340, %v332, %v337
        %v342 = vrsqrt.pop %v320
        %v343 = vmul.f32 %v342, %v320
        %v344 = vmul.f32 %v343, %v342
        %v345 = vmul.f32 0.5, %v344
        %v346 = vsub.f32 1.5, %v345
        %v347 = vmul.f32 %v342, %v346
        %vm348 = vweird.f32 %v320
        %vm349 = vweird.f32 %v342
        %vm350 = vmor %vm348, %vm349
        %v351 = vsel %vm350, %v342, %v347
        %v352 = vrsqrt.pop %v321
        %v353 = vmul.f32 %v352, %v321
        %v354 = vmul.f32 %v353, %v352
        %v355 = vmul.f32 0.5, %v354
        %v356 = vsub.f32 1.5, %v355
        %v357 = vmul.f32 %v352, %v356
        %vm358 = vweird.f32 %v321
        %vm359 = vweird.f32 %v352
        %vm360 = vmor %vm358, %vm359
        %v361 = vsel %vm360, %v352, %v357
        %v362 = vmul.f32 %v302, %v331
        %v363 = vmul.f32 %v303, %v341
        %v364 = vmul.f32 %v304, %v351
        %v365 = vmul.f32 %v305, %v361
        %v366 = vmul.f32 %v228, %v331
        %v367 = vmul.f32 %v229, %v341
        %v368 = vmul.f32 %v230, %v351
        %v369 = vmul.f32 %v231, %v361
        %v370 = vsub.f32 %v366, %v362
        %v371 = vsub.f32 %v367, %v363
        %v372 = vsub.f32 %v368, %v364
        %v373 = vsub.f32 %v369, %v365
        %v374 = vmul.f32 %v233, %v331
        %v375 = vmul.f32 %v234, %v341
        %v376 = vmul.f32 %v235, %v351
        %v377 = vmul.f32 %v236, %v361
        %v378 = vsub.f32 %v374, %v362
        %v379 = vsub.f32 %v375, %v363
        %v380 = vsub.f32 %v376, %v364
        %v381 = vsub.f32 %v377, %v365
        %v382 = vld [vmem:[#allocation5] sm:$0xff]
        %v383 = vld [vmem:[#allocation5 + $0x8] sm:$0xff]
        %v384 = vld [vmem:[#allocation5 + $0x10] sm:$0xff]
        %v385 = vld [vmem:[#allocation5 + $0x18] sm:$0xff]
        %v386 = vld [vmem:[#allocation5 + $0x20] sm:$0xff]
        %v387 = vld [vmem:[#allocation5 + $0x28] sm:$0xff]
        %v388 = vld [vmem:[#allocation5 + $0x30] sm:$0xff]
        %v389 = vld [vmem:[#allocation5 + $0x38] sm:$0xff]
        %s390 = scalar_lea.vmem [#allocation5], 64
        %v391 = vld [vmem:[%s390] sm:$0xff]
        %v392 = vld [vmem:[%s390 + $0x8] sm:$0xff]
        %v393 = vld [vmem:[%s390 + $0x10] sm:$0xff]
        %v394 = vld [vmem:[%s390 + $0x18] sm:$0xff]
        %v395 = vld [vmem:[%s390 + $0x20] sm:$0xff]
        %v396 = vld [vmem:[%s390 + $0x28] sm:$0xff]
        %v397 = vld [vmem:[%s390 + $0x30] sm:$0xff]
        %v398 = vld [vmem:[%s390 + $0x38] sm:$0xff]
        %v400 = vsel %vm237, %v378, 0
        %v403 = vsel %vm237, %v379, 0
        %v406 = vsel %vm237, %v380, 0
        %v409 = vsel %vm237, %v381, 0
        %411 = vmatpush.msra.mxu0 0.0
        %412 = vmatpush.msra.mxu0 0.0
        %413 = vmatpush.msra.mxu0 0.0
        %414 = vmatpush.msra.mxu0 0.0
        %415 = vmatpush.msra.mxu0 0.0
        %416 = vmatpush.msra.mxu0 0.0
        %417 = vmatpush.msra.mxu0 0.0
        %418 = vmatpush.msra.mxu0 0.0
        %419 = vmatpush.msra.mxu0 %v398
        %420 = vmatpush.msra.mxu0 %v397
        %421 = vmatpush.msra.mxu0 %v396
        %422 = vmatpush.msra.mxu0 %v395
        %423 = vmatpush.msra.mxu0 %v394
        %424 = vmatpush.msra.mxu0 %v393
        %425 = vmatpush.msra.mxu0 %v392
        %426 = vmatpush.msra.mxu0 %v391
        %427 = vmatmul.f32.gmra.mxu0 %v400
        %v428 = vpop.f32.mrf.mxu0
        %v429 = vadd.f32 0.0, %v428
        %430 = vmatmul.f32.gmra.mxu0 %v403
        %v431 = vpop.f32.mrf.mxu0
        %v432 = vadd.f32 0.0, %v431
        %433 = vmatmul.f32.gmra.mxu0 %v406
        %v434 = vpop.f32.mrf.mxu0
        %v435 = vadd.f32 0.0, %v434
        %436 = vmatmul.f32.gmra.mxu0 %v409
        %v437 = vpop.f32.mrf.mxu0
        %v438 = vadd.f32 0.0, %v437
        %439 = vdwg.mxu0
        %v441 = vsel %vm237, %v370, 0
        %v444 = vsel %vm237, %v371, 0
        %v447 = vsel %vm237, %v372, 0
        %v450 = vsel %vm237, %v373, 0
        %452 = vmatpush.msra.mxu0 0.0
        %453 = vmatpush.msra.mxu0 0.0
        %454 = vmatpush.msra.mxu0 0.0
        %455 = vmatpush.msra.mxu0 0.0
        %456 = vmatpush.msra.mxu0 0.0
        %457 = vmatpush.msra.mxu0 0.0
        %458 = vmatpush.msra.mxu0 0.0
        %459 = vmatpush.msra.mxu0 0.0
        %460 = vmatpush.msra.mxu0 %v389
        %461 = vmatpush.msra.mxu0 %v388
        %462 = vmatpush.msra.mxu0 %v387
        %463 = vmatpush.msra.mxu0 %v386
        %464 = vmatpush.msra.mxu0 %v385
        %465 = vmatpush.msra.mxu0 %v384
        %466 = vmatpush.msra.mxu0 %v383
        %467 = vmatpush.msra.mxu0 %v382
        %468 = vmatmul.f32.gmra.mxu0 %v441
        %v469 = vpop.f32.mrf.mxu0
        %v470 = vadd.f32 %v429, %v469
        %471 = vmatmul.f32.gmra.mxu0 %v444
        %v472 = vpop.f32.mrf.mxu0
        %v473 = vadd.f32 %v432, %v472
        %474 = vmatmul.f32.gmra.mxu0 %v447
        %v475 = vpop.f32.mrf.mxu0
        %v476 = vadd.f32 %v435, %v475
        %477 = vmatmul.f32.gmra.mxu0 %v450
        %v478 = vpop.f32.mrf.mxu0
        %v479 = vadd.f32 %v438, %v478
        %480 = vdwg.mxu0
        %v481 = vld [vmem:[%s2] sm:$0x1]
        %v483 = vperm.slane %v481, 0
        %v485 = vadd.f32 %v470, %v483
        %v486 = vadd.f32 %v473, %v483
        %v487 = vadd.f32 %v476, %v483
        %v488 = vadd.f32 %v479, %v483
        %489 = vst [vmem:[%s225] sm:$0xff] %v485
        %490 = vst [vmem:[%s225 + $0x8] sm:$0xff] %v486
        %491 = vst [vmem:[%s225 + $0x10] sm:$0xff] %v487
        %492 = vst [vmem:[%s225 + $0x18] sm:$0xff] %v488
        %s493 = sand.u32 %s113, 1
        %s494 = scalar_lea.sflag [#allocation4], %s493
        %s495 = sand.u32 %s113, 1
        %s496 = smul.addr %s495, 32
        %s497 = scalar_lea.vmem [#allocation7], %s496
        // Predicated region
        $region41: #{tpu_custom_call.1} parent=31 // pred_check
          %p498 = pneg %p123
        $region42: #{tpu_custom_call.1} parent=31 // pred_check_branch
          %500 = sbr.rel (%p498) target = $region44
        $region43: #{tpu_custom_call.1} parent=31 // pred_region
          %s501 = smul.u32 4, %s25
          %503 = vsyncadd %s494, 0
          %s504 = sadd.s32 %s26, %s501
          %s505 = smul.addr %s504, 8
          %s506 = scalar_lea.hbm %s3, %s505
          %s507 = sshll.u32 %s497, 4
          %s508 = int_to_ptr.vmem [resolvable:$true] %s507
          %s509 = sshll.u32 %s506, 4
          %s510 = int_to_ptr.hbm [resolvable:$true] %s509
          %515 = dma.vmem_to_hbm [thread:$0]  %s508, 512, %s510, %s494, 128, 128, 8
        $region44: #{tpu_custom_call.1} parent=31 // pred_fallthru
          _
      $region32: #{tpu_custom_call.1} parent=5 // pred_fallthru
        _
      %p516 = scmp.le.s32.totalorder 2, %s16
      // Predicated region
      $region45: #{tpu_custom_call.1} parent=5 // pred_check
        %p517 = pneg %p516
      $region46: #{tpu_custom_call.1} parent=5 // pred_check_branch
        %519 = sbr.rel (%p517) target = $region48
      $region47: #{tpu_custom_call.1} parent=5 // pred_region
        %s520 = ssub.s32 %s16, 2
        // Predicated region
        $region49: #{tpu_custom_call.1} parent=47 // pred_check
          %p521 = pneg %p129
        $region50: #{tpu_custom_call.1} parent=47 // pred_check_branch
          %523 = sbr.rel (%p521) target = $region52
        $region51: #{tpu_custom_call.1} parent=47 // pred_region
          %s524 = sand.u32 %s114, 1
          %s525 = scalar_lea.sflag [#allocation4], %s524
          %s526 = sand.u32 %s114, 1
          %s527 = smul.addr %s526, 32
          %s528 = scalar_lea.vmem [#allocation7], %s527
          %530 = dma.done %s525, 512
        $region52: #{tpu_custom_call.1} parent=47 // pred_fallthru
          _
      $region48: #{tpu_custom_call.1} parent=5 // pred_fallthru
        _
    $region6: #{tpu_custom_call.1} parent=1 // loop_footer
      %s20 = sadd.s32 1, %s16
    $region7: #{tpu_custom_call.1} parent=1 // loop_footer_branch
      %15 = sbr.rel target = $region3
    $region8: #{tpu_custom_call.1} parent=1 // loop_exit
      _
    %531 = vsyncpa [#allocation3], 1
    %s532 = scalar_lea.sflag [#allocation3], 1
    %533 = vsyncpa %s532, 1
    %534 = vsyncpa [#allocation6], 1
    %535 = vsyncpa [#allocation4], 1
    %s536 = scalar_lea.sflag [#allocation4], 1
    %537 = vsyncpa %s536, 1

// kernel: tpu_custom_call.1
$region0: #{tpu_custom_call.1}
  #allocation0 [shape = 'u32[]', space=smem, size = 0x4, offset = 0x4, fixed_abs, tag = 'smem constant byte address 0x4 - core index']
  #allocation1 [shape = 'u32[72,128]{1,0:T(1,128)}', space=vmem, size = 0x9000, scoped, tag = 'internal scratch']
  %s0 = inlined_call_operand.hbm [shape: f32[16,2,8,64], index: 0, kind: input, shape index: {}]
  %s1 = inlined_call_operand.hbm [shape: f32[2,64,128], index: 1, kind: input, shape index: {}]
  %s2 = inlined_call_operand.vmem [shape: f32[1,128], index: 2, kind: input, shape index: {}]
  %s3 = inlined_call_operand.hbm [shape: f32[16,8,128], index: 3, kind: output, shape index: {}]
  %s4 = sld [smem:[#allocation0]]
  $region53: #{tpu_custom_call.1} parent=0
    _
  %s6 = ssub.s32 1, %s4
  %s7 = scalar_select 0, %s6, %s4
  $region1: #{tpu_custom_call.1} parent=0
    #allocation2 [shape = 'u8[65536]{0}', space=vmem, size = 0x10000, scoped, tag = 'input window, operand 0']
    #allocation3 [shape = 's32[2]{0}', space=sflag, size = 0x8, scoped, tag = 'scoped memory for tpu_custom_call.1']
    #allocation4 [shape = 's32[2]{0}', space=sflag, size = 0x8, scoped, tag = 'scoped memory for tpu_custom_call.1']
    #allocation5 [shape = 'u8[65536]{0}', space=vmem, size = 0x10000, scoped, tag = 'input window, operand 1, single buffered']
    #allocation6 [shape = 's32[1]{0}', space=sflag, size = 0x4, scoped, tag = 'scoped memory for tpu_custom_call.1']
    #allocation7 [shape = 'u8[32768]{0}', space=vmem, size = 0x8000, scoped, tag = 'output window, operand 0']
    %8 = vsyncpa [#allocation3], 0
    %s9 = scalar_lea.sflag [#allocation3], 1
    %10 = vsyncpa %s9, 0
    %11 = vsyncpa [#allocation6], 0
    %12 = vsyncpa [#allocation4], 0
    %s13 = scalar_lea.sflag [#allocation4], 1
    %14 = vsyncpa %s13, 0
    loop: start=0, step=1, limit=6
    $region2: #{tpu_custom_call.1} parent=1 // loop_pre_header
      _
    $region3: #{tpu_custom_call.1} parent=1 // loop_header
      %s16 = sphi 0, %s20
      %p17 = scmp.ge.s32.totalorder %s16, 6
      %s23 = sphi 0, %s35
      %s24 = sphi 0, %s31
      %s25 = sphi 0, %s23
      %s26 = sphi 0, %s24
      %s27 = sphi 0, %s25
      %s28 = sphi 0, %s26
      %s40 = sphi 0, %s42
      %s43 = sphi 0, %s40
      %s44 = sphi 0, %s43
      %s60 = sphi 0, %s44
      %s64 = sphi 0, %s64
      %s66 = sphi 0, %s64
      %s67 = sphi 0, %s66
      %s81 = sphi 0, %s67
      %s85 = sphi 0, %s85
      %s87 = sphi 0, %s85
      %s88 = sphi 0, %s87
      %s102 = sphi 0, %s88
      %s110 = sphi 0, %s112
      %s113 = sphi 0, %s110
      %s114 = sphi 0, %s113
      %s130 = sphi 0, %s114
    $region4: #{tpu_custom_call.1} parent=1 // loop_header_branch
      %19 = sbr.rel (%p17) target = $region8
    $region5: #{tpu_custom_call.1} parent=1 // loop_body
      %s21 = ssub.s32 %s16, 1
      %s22 = ssub.s32 %s16, 2
      %s29 = sadd.s32 1, %s24
      %p30 = scmp.ge.s32.totalorder %s29, 1
      %s31 = scalar_select %p30, 0, %s29
      %s32 = sadd.s32 1, %s23
      %s33 = scalar_select %p30, %s32, %s23
      %p34 = scmp.ge.s32.totalorder %s33, 4
      %s35 = scalar_select %p34, 0, %s33
      %s36 = ssub.s32 %s23, %s35
      %s37 = ssub.s32 %s24, %s31
      %s38 = sor.u32 %s36, %s37
      %p39 = scmp.eq.s32.totalorder %s38, 0
      %s41 = sadd.s32 %s40, 1
      %s42 = scalar_select %p39, %s40, %s41
      %p45 = pneg %p39
      %p46 = scmp.eq.s32.totalorder %s16, 3
      %p47 = por %p45, %p46
      %p48 = scmp.ne.s32.totalorder %s40, %s43
      %p49 = scmp.eq.s32.totalorder %s16, 0
      %p50 = por %p48, %p49
      %p51 = scmp.ne.s32.totalorder %s40, %s43
      %p52 = scmp.eq.s32.totalorder %s21, 3
      %p53 = por %p51, %p52
      %p54 = scmp.ne.s32.totalorder %s43, %s44
      %p55 = scmp.eq.s32.totalorder %s21, 0
      %p56 = por %p54, %p55
      %p57 = scmp.ne.s32.totalorder %s43, %s44
      %p58 = scmp.eq.s32.totalorder %s22, 3
      %p59 = por %p57, %p58
      %p61 = scmp.ne.s32.totalorder %s44, %s60
      %p62 = scmp.eq.s32.totalorder %s22, 0
      %p63 = por %p61, %p62
      %s65 = sadd.s32 %s64, 1
      %p68 = scmp.eq.s32.totalorder %s16, 3
      %p69 = scmp.ne.s32.totalorder %s64, %s66
      %p70 = scmp.eq.s32.totalorder %s16, 0
      %p71 = por %p69, %p70
      %p72 = scmp.ne.s32.totalorder %s64, %s66
      %p73 = scmp.eq.s32.totalorder %s21, 3
      %p74 = por %p72, %p73
      %p75 = scmp.ne.s32.totalorder %s66, %s67
      %p76 = scmp.eq.s32.totalorder %s21, 0
      %p77 = por %p75, %p76
      %p78 = scmp.ne.s32.totalorder %s66, %s67
      %p79 = scmp.eq.s32.totalorder %s22, 3
      %p80 = por %p78, %p79
      %p82 = scmp.ne.s32.totalorder %s67, %s81
      %p83 = scmp.eq.s32.totalorder %s22, 0
      %p84 = por %p82, %p83
      %s86 = sadd.s32 %s85, 1
      %p89 = scmp.eq.s32.totalorder %s16, 3
      %p90 = scmp.ne.s32.totalorder %s85, %s87
      %p91 = scmp.eq.s32.totalorder %s16, 0
      %p92 = por %p90, %p91
      %p93 = scmp.ne.s32.totalorder %s85, %s87
      %p94 = scmp.eq.s32.totalorder %s21, 3
      %p95 = por %p93, %p94
      %p96 = scmp.ne.s32.totalorder %s87, %s88
      %p97 = scmp.eq.s32.totalorder %s21, 0
      %p98 = por %p96, %p97
      %p99 = scmp.ne.s32.totalorder %s87, %s88
      %p100 = scmp.eq.s32.totalorder %s22, 3
      %p101 = por %p99, %p100
      %p103 = scmp.ne.s32.totalorder %s88, %s102
      %p104 = scmp.eq.s32.totalorder %s22, 0
      %p105 = por %p103, %p104
      %s106 = ssub.s32 %s23, %s35
      %s107 = ssub.s32 %s24, %s31
      %s108 = sor.u32 %s106, %s107
      %p109 = scmp.eq.s32.totalorder %s108, 0
      %s111 = sadd.s32 %s110, 1
      %s112 = scalar_select %p109, %s110, %s111
      %p115 = pneg %p109
      %p116 = scmp.eq.s32.totalorder %s16, 3
      %p117 = por %p115, %p116
      %p118 = scmp.ne.s32.totalorder %s110, %s113
      %p119 = scmp.eq.s32.totalorder %s16, 0
      %p120 = por %p118, %p119
      %p121 = scmp.ne.s32.totalorder %s110, %s113
      %p122 = scmp.eq.s32.totalorder %s21, 3
      %p123 = por %p121, %p122
      %p124 = scmp.ne.s32.totalorder %s113, %s114
      %p125 = scmp.eq.s32.totalorder %s21, 0
      %p126 = por %p124, %p125
      %p127 = scmp.ne.s32.totalorder %s113, %s114
      %p128 = scmp.eq.s32.totalorder %s22, 3
      %p129 = por %p127, %p128
      %p131 = scmp.ne.s32.totalorder %s114, %s130
      %p132 = scmp.eq.s32.totalorder %s22, 0
      %p133 = por %p131, %p132
      %p134 = scmp.le.s32.totalorder 1, %s16
      %p135 = scmp.lt.s32.totalorder %s16, 5
      %p136 = pnand %p134, %p135
      %p137 = pneg %p136
      // Predicated region
      $region9: #{tpu_custom_call.1} parent=5 // pred_check
        _
      $region10: #{tpu_custom_call.1} parent=5 // pred_check_branch
        %139 = sbr.rel (%p136) target = $region12
      $region11: #{tpu_custom_call.1} parent=5 // pred_region
        %s140 = ssub.s32 %s16, 1
        // Predicated region
        $region13: #{tpu_custom_call.1} parent=11 // pred_check
          %p141 = pneg %p77
        $region14: #{tpu_custom_call.1} parent=11 // pred_check_branch
          %143 = sbr.rel (%p141) target = $region16
        $region15: #{tpu_custom_call.1} parent=11 // pred_region
          %145 = vsyncadd [#allocation6], 0
          %s146 = sshll.u32 %s1, 4
          %s147 = int_to_ptr.hbm [resolvable:$true] %s146
          %s148 = sshll.u32 [#allocation5], 4
          %s149 = int_to_ptr.vmem [resolvable:$true] %s148
          %154 = dma.hbm_to_vmem [thread:$0]  %s147, 2048, %s149, [#allocation6], 128, 128, 8
        $region16: #{tpu_custom_call.1} parent=11 // pred_fallthru
          _
        // Predicated region
        $region17: #{tpu_custom_call.1} parent=11 // pred_check
          %p155 = pneg %p98
        $region18: #{tpu_custom_call.1} parent=11 // pred_check_branch
          %157 = sbr.rel (%p155) target = $region20
        $region19: #{tpu_custom_call.1} parent=11 // pred_region
          _
        $region20: #{tpu_custom_call.1} parent=11 // pred_fallthru
          _
      $region12: #{tpu_custom_call.1} parent=5 // pred_fallthru
        _
      %p158 = scmp.lt.s32.totalorder %s16, 4
      // Predicated region
      $region21: #{tpu_custom_call.1} parent=5 // pred_check
        %p159 = pneg %p158
      $region22: #{tpu_custom_call.1} parent=5 // pred_check_branch
        %161 = sbr.rel (%p159) target = $region24
      $region23: #{tpu_custom_call.1} parent=5 // pred_region
        // Predicated region
        $region25: #{tpu_custom_call.1} parent=23 // pred_check
          %p162 = pneg %p50
        $region26: #{tpu_custom_call.1} parent=23 // pred_check_branch
          %164 = sbr.rel (%p162) target = $region28
        $region27: #{tpu_custom_call.1} parent=23 // pred_region
          %s165 = sand.u32 %s40, 1
          %s166 = scalar_lea.sflag [#allocation3], %s165
          %s167 = sand.u32 %s40, 1
          %s168 = smul.addr %s167, 64
          %s169 = scalar_lea.vmem [#allocation2], %s168
          %s170 = smul.u32 4, %s23
          %172 = vsyncadd %s166, 0
          %s173 = smul.addr %s170, 2
          %s174 = sadd.s32 %s24, %s173
          %s175 = smul.addr %s174, 8
          %s176 = scalar_lea.hbm %s0, %s175
          %s177 = sshll.u32 %s176, 4
          %s178 = int_to_ptr.hbm [resolvable:$true] %s177
          %s179 = sshll.u32 %s169, 4
          %s180 = int_to_ptr.vmem [resolvable:$true] %s179
          %185 = dma.hbm_to_vmem [thread:$0]  %s178, 1024, %s180, %s166, 128, 128, 8
        $region28: #{tpu_custom_call.1} parent=23 // pred_fallthru
          _
      $region24: #{tpu_custom_call.1} parent=5 // pred_fallthru
        _
      %p186 = scmp.le.s32.totalorder 1, %s16
      %p187 = scmp.lt.s32.totalorder %s16, 5
      %p188 = pnand %p186, %p187
      %p189 = pneg %p188
      // Predicated region
      $region29: #{tpu_custom_call.1} parent=5 // pred_check
        _
      $region30: #{tpu_custom_call.1} parent=5 // pred_check_branch
        %191 = sbr.rel (%p188) target = $region32
      $region31: #{tpu_custom_call.1} parent=5 // pred_region
        %s192 = ssub.s32 %s16, 1
        %s193 = sand.u32 %s43, 1
        %s194 = scalar_lea.sflag [#allocation3], %s193
        %s195 = sand.u32 %s43, 1
        %s196 = smul.addr %s195, 64
        %s197 = scalar_lea.vmem [#allocation2], %s196
        // Predicated region
        $region33: #{tpu_custom_call.1} parent=31 // pred_check
          %p198 = pneg %p56
        $region34: #{tpu_custom_call.1} parent=31 // pred_check_branch
          %200 = sbr.rel (%p198) target = $region36
        $region35: #{tpu_custom_call.1} parent=31 // pred_region
          %202 = dma.done %s194, 1024
        $region36: #{tpu_custom_call.1} parent=31 // pred_fallthru
          _
        // Predicated region
        $region37: #{tpu_custom_call.1} parent=31 // pred_check
          %p203 = pneg %p77
        $region38: #{tpu_custom_call.1} parent=31 // pred_check_branch
          %205 = sbr.rel (%p203) target = $region40
        $region39: #{tpu_custom_call.1} parent=31 // pred_region
          %207 = dma.done [#allocation6], 2048
        $region40: #{tpu_custom_call.1} parent=31 // pred_fallthru
          _
        %s208 = sand.u32 %s43, 1
        %s209 = scalar_lea.sflag [#allocation3], %s208
        %s210 = sand.u32 %s43, 1
        %s211 = smul.addr %s210, 64
        %s212 = scalar_lea.vmem [#allocation2], %s211
        %p213 = pneg %p56
        %p214 = pneg %p53
        %p215 = pneg %p77
        %p216 = pneg %p74
        %p217 = pneg %p98
        %p218 = pneg %p95
        %p219 = pneg %p126
        %p220 = pneg %p123
        %s221 = sand.u32 %s113, 1
        %s222 = scalar_lea.sflag [#allocation4], %s221
        %s223 = sand.u32 %s113, 1
        %s224 = smul.addr %s223, 32
        %s225 = scalar_lea.vmem [#allocation7], %s224
        %s226 = smul.u32 4, %s25
        %s227 = smul.u32 4, %s25
        %v228 = vld [vmem:[%s197] sm:$0xff]
        %v229 = vld [vmem:[%s197 + $0x10] sm:$0xff]
        %v230 = vld [vmem:[%s197 + $0x20] sm:$0xff]
        %v231 = vld [vmem:[%s197 + $0x30] sm:$0xff]
        %s232 = scalar_lea.vmem %s197, 8 [#allocation2]
        %v233 = vld [vmem:[%s232] sm:$0xff]
        %v234 = vld [vmem:[%s232 + $0x10] sm:$0xff]
        %v235 = vld [vmem:[%s232 + $0x20] sm:$0xff]
        %v236 = vld [vmem:[%s232 + $0x30] sm:$0xff]
        %vm237 = vcmask 523264
        %v238 = vsel %vm237, %v228, 0.0
        %239 = vadd.xlane.f32.xlu0 %v238
        %v240 = vpop.xlane.xlu0 %239
        %v241 = vsel %vm237, %v229, 0.0
        %242 = vadd.xlane.f32.xlu0 %v241
        %v243 = vpop.xlane.xlu0 %242
        %v244 = vsel %vm237, %v230, 0.0
        %245 = vadd.xlane.f32.xlu0 %v244
        %v246 = vpop.xlane.xlu0 %245
        %v247 = vsel %vm237, %v231, 0.0
        %248 = vadd.xlane.f32.xlu0 %v247
        %v249 = vpop.xlane.xlu0 %248
        %v250 = vsel %vm237, %v233, 0.0
        %251 = vadd.xlane.f32.xlu0 %v250
        %v252 = vpop.xlane.xlu0 %251
        %v253 = vsel %vm237, %v234, 0.0
        %254 = vadd.xlane.f32.xlu0 %v253
        %v255 = vpop.xlane.xlu0 %254
        %v256 = vsel %vm237, %v235, 0.0
        %257 = vadd.xlane.f32.xlu0 %v256
        %v258 = vpop.xlane.xlu0 %257
        %v259 = vsel %vm237, %v236, 0.0
        %260 = vadd.xlane.f32.xlu0 %v259
        %v261 = vpop.xlane.xlu0 %260
        %v262 = vadd.f32 %v240, %v252
        %v263 = vadd.f32 %v243, %v255
        %v264 = vadd.f32 %v246, %v258
        %v265 = vadd.f32 %v249, %v261
        %v266 = vmul.f32 %v228, %v228
        %v267 = vmul.f32 %v229, %v229
        %v268 = vmul.f32 %v230, %v230
        %v269 = vmul.f32 %v231, %v231
        %v270 = vsel %vm237, %v266, 0.0
        %271 = vadd.xlane.f32.xlu0 %v270
        %v272 = vpop.xlane.xlu0 %271
        %v273 = vsel %vm237, %v267, 0.0
        %274 = vadd.xlane.f32.xlu0 %v273
        %v275 = vpop.xlane.xlu0 %274
        %v276 = vsel %vm237, %v268, 0.0
        %277 = vadd.xlane.f32.xlu0 %v276
        %v278 = vpop.xlane.xlu0 %277
        %v279 = vsel %vm237, %v269, 0.0
        %280 = vadd.xlane.f32.xlu0 %v279
        %v281 = vpop.xlane.xlu0 %280
        %v282 = vmul.f32 %v233, %v233
        %v283 = vmul.f32 %v234, %v234
        %v284 = vmul.f32 %v235, %v235
        %v285 = vmul.f32 %v236, %v236
        %v286 = vsel %vm237, %v282, 0.0
        %287 = vadd.xlane.f32.xlu0 %v286
        %v288 = vpop.xlane.xlu0 %287
        %v289 = vsel %vm237, %v283, 0.0
        %290 = vadd.xlane.f32.xlu0 %v289
        %v291 = vpop.xlane.xlu0 %290
        %v292 = vsel %vm237, %v284, 0.0
        %293 = vadd.xlane.f32.xlu0 %v292
        %v294 = vpop.xlane.xlu0 %293
        %v295 = vsel %vm237, %v285, 0.0
        %296 = vadd.xlane.f32.xlu0 %v295
        %v297 = vpop.xlane.xlu0 %296
        %v298 = vadd.f32 %v272, %v288
        %v299 = vadd.f32 %v275, %v291
        %v300 = vadd.f32 %v278, %v294
        %v301 = vadd.f32 %v281, %v297
        %v302 = vmul.f32 %v262, 0.0078125
        %v303 = vmul.f32 %v263, 0.0078125
        %v304 = vmul.f32 %v264, 0.0078125
        %v305 = vmul.f32 %v265, 0.0078125
        %v306 = vmul.f32 %v298, 0.0078125
        %v307 = vmul.f32 %v299, 0.0078125
        %v308 = vmul.f32 %v300, 0.0078125
        %v309 = vmul.f32 %v301, 0.0078125
        %v310 = vmul.f32 %v302, %v302
        %v311 = vmul.f32 %v303, %v303
        %v312 = vmul.f32 %v304, %v304
        %v313 = vmul.f32 %v305, %v305
        %v314 = vsub.f32 %v306, %v310
        %v315 = vsub.f32 %v307, %v311
        %v316 = vsub.f32 %v308, %v312
        %v317 = vsub.f32 %v309, %v313
        %v318 = vadd.f32 %v314, 1e-05
        %v319 = vadd.f32 %v315, 1e-05
        %v320 = vadd.f32 %v316, 1e-05
        %v321 = vadd.f32 %v317, 1e-05
        %v322 = vrsqrt.pop %v318
        %v323 = vmul.f32 %v322, %v318
        %v324 = vmul.f32 %v323, %v322
        %v325 = vmul.f32 0.5, %v324
        %v326 = vsub.f32 1.5, %v325
        %v327 = vmul.f32 %v322, %v326
        %vm328 = vweird.f32 %v318
        %vm329 = vweird.f32 %v322
        %vm330 = vmor %vm328, %vm329
        %v331 = vsel %vm330, %v322, %v327
        %v332 = vrsqrt.pop %v319
        %v333 = vmul.f32 %v332, %v319
        %v334 = vmul.f32 %v333, %v332
        %v335 = vmul.f32 0.5, %v334
        %v336 = vsub.f32 1.5, %v335
        %v337 = vmul.f32 %v332, %v336
        %vm338 = vweird.f32 %v319
        %vm339 = vweird.f32 %v332
        %vm340 = vmor %vm338, %vm339
        %v341 = vsel %vm340, %v332, %v337
        %v342 = vrsqrt.pop %v320
        %v343 = vmul.f32 %v342, %v320
        %v344 = vmul.f32 %v343, %v342
        %v345 = vmul.f32 0.5, %v344
        %v346 = vsub.f32 1.5, %v345
        %v347 = vmul.f32 %v342, %v346
        %vm348 = vweird.f32 %v320
        %vm349 = vweird.f32 %v342
        %vm350 = vmor %vm348, %vm349
        %v351 = vsel %vm350, %v342, %v347
        %v352 = vrsqrt.pop %v321
        %v353 = vmul.f32 %v352, %v321
        %v354 = vmul.f32 %v353, %v352
        %v355 = vmul.f32 0.5, %v354
        %v356 = vsub.f32 1.5, %v355
        %v357 = vmul.f32 %v352, %v356
        %vm358 = vweird.f32 %v321
        %vm359 = vweird.f32 %v352
        %vm360 = vmor %vm358, %vm359
        %v361 = vsel %vm360, %v352, %v357
        %v362 = vmul.f32 %v302, %v331
        %v363 = vmul.f32 %v303, %v341
        %v364 = vmul.f32 %v304, %v351
        %v365 = vmul.f32 %v305, %v361
        %v366 = vmul.f32 %v228, %v331
        %v367 = vmul.f32 %v229, %v341
        %v368 = vmul.f32 %v230, %v351
        %v369 = vmul.f32 %v231, %v361
        %v370 = vsub.f32 %v366, %v362
        %v371 = vsub.f32 %v367, %v363
        %v372 = vsub.f32 %v368, %v364
        %v373 = vsub.f32 %v369, %v365
        %v374 = vmul.f32 %v233, %v331
        %v375 = vmul.f32 %v234, %v341
        %v376 = vmul.f32 %v235, %v351
        %v377 = vmul.f32 %v236, %v361
        %v378 = vsub.f32 %v374, %v362
        %v379 = vsub.f32 %v375, %v363
        %v380 = vsub.f32 %v376, %v364
        %v381 = vsub.f32 %v377, %v365
        %v382 = vld [vmem:[#allocation5] sm:$0xff]
        %v383 = vld [vmem:[#allocation5 + $0x8] sm:$0xff]
        %v384 = vld [vmem:[#allocation5 + $0x10] sm:$0xff]
        %v385 = vld [vmem:[#allocation5 + $0x18] sm:$0xff]
        %v386 = vld [vmem:[#allocation5 + $0x20] sm:$0xff]
        %v387 = vld [vmem:[#allocation5 + $0x28] sm:$0xff]
        %v388 = vld [vmem:[#allocation5 + $0x30] sm:$0xff]
        %v389 = vld [vmem:[#allocation5 + $0x38] sm:$0xff]
        %s390 = scalar_lea.vmem [#allocation5], 64
        %v391 = vld [vmem:[%s390] sm:$0xff]
        %v392 = vld [vmem:[%s390 + $0x8] sm:$0xff]
        %v393 = vld [vmem:[%s390 + $0x10] sm:$0xff]
        %v394 = vld [vmem:[%s390 + $0x18] sm:$0xff]
        %v395 = vld [vmem:[%s390 + $0x20] sm:$0xff]
        %v396 = vld [vmem:[%s390 + $0x28] sm:$0xff]
        %v397 = vld [vmem:[%s390 + $0x30] sm:$0xff]
        %v398 = vld [vmem:[%s390 + $0x38] sm:$0xff]
        %v400 = vsel %vm237, %v378, 0
        %v403 = vsel %vm237, %v379, 0
        %v406 = vsel %vm237, %v380, 0
        %v409 = vsel %vm237, %v381, 0
        %411 = vmatpush.msra.mxu0 0.0
        %412 = vmatpush.msra.mxu0 0.0
        %413 = vmatpush.msra.mxu0 0.0
        %414 = vmatpush.msra.mxu0 0.0
        %415 = vmatpush.msra.mxu0 0.0
        %416 = vmatpush.msra.mxu0 0.0
        %417 = vmatpush.msra.mxu0 0.0
        %418 = vmatpush.msra.mxu0 0.0
        %419 = vmatpush.msra.mxu0 %v398
        %420 = vmatpush.msra.mxu0 %v397
        %421 = vmatpush.msra.mxu0 %v396
        %422 = vmatpush.msra.mxu0 %v395
        %423 = vmatpush.msra.mxu0 %v394
        %424 = vmatpush.msra.mxu0 %v393
        %425 = vmatpush.msra.mxu0 %v392
        %426 = vmatpush.msra.mxu0 %v391
        %427 = vmatmul.f32.gmra.mxu0 %v400
        %v428 = vpop.f32.mrf.mxu0
        %v429 = vadd.f32 0.0, %v428
        %430 = vmatmul.f32.gmra.mxu0 %v403
        %v431 = vpop.f32.mrf.mxu0
        %v432 = vadd.f32 0.0, %v431
        %433 = vmatmul.f32.gmra.mxu0 %v406
        %v434 = vpop.f32.mrf.mxu0
        %v435 = vadd.f32 0.0, %v434
        %436 = vmatmul.f32.gmra.mxu0 %v409
        %v437 = vpop.f32.mrf.mxu0
        %v438 = vadd.f32 0.0, %v437
        %439 = vdwg.mxu0
        %v441 = vsel %vm237, %v370, 0
        %v444 = vsel %vm237, %v371, 0
        %v447 = vsel %vm237, %v372, 0
        %v450 = vsel %vm237, %v373, 0
        %452 = vmatpush.msra.mxu0 0.0
        %453 = vmatpush.msra.mxu0 0.0
        %454 = vmatpush.msra.mxu0 0.0
        %455 = vmatpush.msra.mxu0 0.0
        %456 = vmatpush.msra.mxu0 0.0
        %457 = vmatpush.msra.mxu0 0.0
        %458 = vmatpush.msra.mxu0 0.0
        %459 = vmatpush.msra.mxu0 0.0
        %460 = vmatpush.msra.mxu0 %v389
        %461 = vmatpush.msra.mxu0 %v388
        %462 = vmatpush.msra.mxu0 %v387
        %463 = vmatpush.msra.mxu0 %v386
        %464 = vmatpush.msra.mxu0 %v385
        %465 = vmatpush.msra.mxu0 %v384
        %466 = vmatpush.msra.mxu0 %v383
        %467 = vmatpush.msra.mxu0 %v382
        %468 = vmatmul.f32.gmra.mxu0 %v441
        %v469 = vpop.f32.mrf.mxu0
        %v470 = vadd.f32 %v429, %v469
        %471 = vmatmul.f32.gmra.mxu0 %v444
        %v472 = vpop.f32.mrf.mxu0
        %v473 = vadd.f32 %v432, %v472
        %474 = vmatmul.f32.gmra.mxu0 %v447
        %v475 = vpop.f32.mrf.mxu0
        %v476 = vadd.f32 %v435, %v475
        %477 = vmatmul.f32.gmra.mxu0 %v450
        %v478 = vpop.f32.mrf.mxu0
        %v479 = vadd.f32 %v438, %v478
        %480 = vdwg.mxu0
        %v481 = vld [vmem:[%s2] sm:$0x1]
        %v483 = vperm.slane %v481, 0
        %v485 = vadd.f32 %v470, %v483
        %v486 = vadd.f32 %v473, %v483
        %v487 = vadd.f32 %v476, %v483
        %v488 = vadd.f32 %v479, %v483
        %489 = vst [vmem:[%s225] sm:$0xff] %v485
        %490 = vst [vmem:[%s225 + $0x8] sm:$0xff] %v486
        %491 = vst [vmem:[%s225 + $0x10] sm:$0xff] %v487
        %492 = vst [vmem:[%s225 + $0x18] sm:$0xff] %v488
        %s493 = sand.u32 %s113, 1
        %s494 = scalar_lea.sflag [#allocation4], %s493
        %s495 = sand.u32 %s113, 1
        %s496 = smul.addr %s495, 32
        %s497 = scalar_lea.vmem [#allocation7], %s496
        // Predicated region
        $region41: #{tpu_custom_call.1} parent=31 // pred_check
          %p498 = pneg %p123
        $region42: #{tpu_custom_call.1} parent=31 // pred_check_branch
          %500 = sbr.rel (%p498) target = $region44
        $region43: #{tpu_custom_call.1} parent=31 // pred_region
          %s501 = smul.u32 4, %s25
          %503 = vsyncadd %s494, 0
          %s504 = sadd.s32 %s26, %s501
          %s505 = smul.addr %s504, 8
          %s506 = scalar_lea.hbm %s3, %s505
          %s507 = sshll.u32 %s497, 4
          %s508 = int_to_ptr.vmem [resolvable:$true] %s507
          %s509 = sshll.u32 %s506, 4
          %s510 = int_to_ptr.hbm [resolvable:$true] %s509
          %515 = dma.vmem_to_hbm [thread:$0]  %s508, 512, %s510, %s494, 128, 128, 8
        $region44: #{tpu_custom_call.1} parent=31 // pred_fallthru
          _
      $region32: #{tpu_custom_call.1} parent=5 // pred_fallthru
        _
      %p516 = scmp.le.s32.totalorder 2, %s16
      // Predicated region
      $region45: #{tpu_custom_call.1} parent=5 // pred_check
        %p517 = pneg %p516
      $region46: #{tpu_custom_call.1} parent=5 // pred_check_branch
        %519 = sbr.rel (%p517) target = $region48
      $region47: #{tpu_custom_call.1} parent=5 // pred_region
        %s520 = ssub.s32 %s16, 2
        // Predicated region
        $region49: #{tpu_custom_call.1} parent=47 // pred_check
          %p521 = pneg %p129
        $region50: #{tpu_custom_call.1} parent=47 // pred_check_branch
          %523 = sbr.rel (%p521) target = $region52
        $region51: #{tpu_custom_call.1} parent=47 // pred_region
          %s524 = sand.u32 %s114, 1
          %s525 = scalar_lea.sflag [#allocation4], %s524
          %s526 = sand.u32 %s114, 1
          %s527 = smul.addr %s526, 32
          %s528 = scalar_lea.vmem [#allocation7], %s527
          %530 = dma.done %s525, 512
        $region52: #{tpu_custom_call.1} parent=47 // pred_fallthru
          _
      $region48: #{tpu_custom_call.1} parent=5 // pred_fallthru
        _
    $region6: #{tpu_custom_call.1} parent=1 // loop_footer
      %s20 = sadd.s32 1, %s16
    $region7: #{tpu_custom_call.1} parent=1 // loop_footer_branch
      %15 = sbr.rel target = $region3
    $region8: #{tpu_custom_call.1} parent=1 // loop_exit
      _
    %531 = vsyncpa [#allocation3], 1
    %s532 = scalar_lea.sflag [#allocation3], 1
    %533 = vsyncpa %s532, 1
    %534 = vsyncpa [#allocation6], 1
    %535 = vsyncpa [#allocation4], 1
    %s536 = scalar_lea.sflag [#allocation4], 1
    %537 = vsyncpa %s536, 1

</llo_original>
